<compile_context>
chip_gen: v7x
topology: tpu7x:2x2x1
jax: 0.10.0
libtpu: 0.0.40
codegen_flags: <defaults>
</compile_context>

<pallas_src>
import numpy as np
import jax
import jax.numpy as jnp
from jax import lax
from jax.experimental import pallas as pl
from jax.experimental.pallas import tpu as pltpu


def _round_up(x, m):
    return (x + m - 1) // m * m


# ---------------------------------------------------------------------------
# Kernel A: hoisted input projection + serial GRU recurrence (per batch block)
# ---------------------------------------------------------------------------
def gru_kernel(x_ref, mask_ref, h0_ref, wih_ref, whh_ref, bi_ref, bhn_ref,
               hs_out_ref, gi_scratch, hs_scratch):
    T, Bb, Dp = x_ref.shape
    Hp = h0_ref.shape[1]

    # Phase 1: input projection for ALL timesteps of this batch block in one
    # lane-dense MXU pass (bf16 operands, f32 accumulation).  r/z hidden
    # biases are pre-folded into bi, so only h @ W_hh remains per step.
    gi = jnp.dot(x_ref[...].reshape(T * Bb, Dp), wih_ref[...],
                 preferred_element_type=jnp.float32) + bi_ref[...]       # (T*Bb, 3Hp)
    gi_scratch[...] = gi.reshape(T, Bb, 3 * Hp)

    # Phase 2: serial recurrence.  Time-major scratch => per-step accesses are
    # dense (Bb, .) slabs; gate slices sit on 128-lane vreg boundaries.
    whh = whh_ref[...]
    bhn = bhn_ref[...]

    def step(t, h):
        gi_t = gi_scratch[t]                                             # (Bb, 3Hp)
        gh = jnp.dot(h.astype(whh.dtype), whh,
                     preferred_element_type=jnp.float32)                 # (Bb, 3Hp)
        r = jax.nn.sigmoid(gi_t[:, 0:Hp] + gh[:, 0:Hp])
        z = jax.nn.sigmoid(gi_t[:, Hp:2 * Hp] + gh[:, Hp:2 * Hp])
        n = jnp.tanh(gi_t[:, 2 * Hp:] + r * (gh[:, 2 * Hp:] + bhn))
        h_new = (1.0 - z) * n + z * h
        hs_scratch[t] = h_new
        return h_new

    lax.fori_loop(0, T, step, h0_ref[...])

    # Epilogue: single pack/pad mask (t >= length -> zero hidden state),
    # cast to the matmul dtype, dense store.
    hs_out_ref[...] = (hs_scratch[...] * mask_ref[...]).astype(hs_out_ref.dtype)


# ---------------------------------------------------------------------------
# Kernel B: generator projection + numerically-stable log_softmax (row block)
# ---------------------------------------------------------------------------
def proj_logsoftmax_kernel(hs_ref, wout_ref, bout_ref, out_ref):
    logits = jnp.dot(hs_ref[...], wout_ref[...],
                     preferred_element_type=jnp.float32) + bout_ref[...]  # (Rb, Vp)
    m = jnp.max(logits, axis=-1, keepdims=True)
    lse = m + jnp.log(jnp.sum(jnp.exp(logits - m), axis=-1, keepdims=True))
    out_ref[...] = logits - lse


# ---------------------------------------------------------------------------
# Block-size heuristics (sized against the ~32 MiB scoped-VMEM default, which
# is also safe for v7x's 64 MiB physical VMEM).
# ---------------------------------------------------------------------------
def _pick_batch_block(b_pad, t, d_pad, h_pad, budget_bytes=8 * 1024 * 1024):
    best = 8
    for b in range(8, b_pad + 1, 8):
        if b_pad % b == 0:
            foot = (t * b * (d_pad + 3 * h_pad + 2 * h_pad) * 4
                    + (d_pad + h_pad) * 3 * h_pad * 4)
            if foot <= budget_bytes:
                best = b
    return best


def _pick_time_chunk(t, b_pad, v_pad, budget_bytes=8 * 1024 * 1024):
    best = 1
    for d in range(1, t + 1):
        if t % d == 0 and b_pad * d * v_pad * 8 <= budget_bytes:
            best = d
    return best


# ---------------------------------------------------------------------------
# Wrapper (glue: concat, padding to TPU-friendly shapes, parameter plumbing)
# ---------------------------------------------------------------------------
def decoder_forward(params, context_embedding, target_embedding, target_lengths,
                    post_hidden_state, *, matmul_dtype=jnp.bfloat16):
    """context_embedding: (B, turn_hidden); target_embedding: (B, T, E);
    target_lengths: (B,) int; post_hidden_state: (B, H).
    Returns (B, max(lengths), total_words + 1) log-probs."""
    B = target_embedding.shape[0]
    H = post_hidden_state.shape[1]
    D_in = params["w_ih"].shape[0]
    V = params["w_out"].shape[1]

    # pad_packed_sequence semantics: output time length = max(target_lengths).
    # (Concretized on host -> distinct max lengths recompile; operational only.)
    T = int(np.max(np.asarray(target_lengths)))

    B_pad = _round_up(B, 8)        # sublane multiple
    H_pad = _round_up(H, 128)      # lane-dense hidden / gate slices
    V_pad = _round_up(V, 128)      # lane-dense vocab (unmasked output stores)
    D_pad = _round_up(D_in, 128)   # full-K MXU passes in Phase 1
    NEG = -1e30                    # padded vocab logits contribute ~0 to softmax

    # -- inputs: concat(target, repeat(context)), pad, go time-major.
    tgt = target_embedding[:, :T, :].astype(jnp.float32)
    ctx = jnp.broadcast_to(context_embedding[:, None, :].astype(jnp.float32),
                           (B, T, context_embedding.shape[-1]))
    x = jnp.concatenate([tgt, ctx], axis=-1)                         # (B, T, D_in)
    x = jnp.pad(x, ((0, B_pad - B), (0, 0), (0, D_pad - D_in)))
    x_tm = jnp.transpose(x, (1, 0, 2)).astype(matmul_dtype)          # (T, B_pad, D_pad)

    lengths = jnp.zeros((B_pad,), jnp.int32).at[:B].set(
        jnp.asarray(target_lengths, jnp.int32))
    mask_tm = (jnp.arange(T, dtype=jnp.int32)[:, None] < lengths[None, :])
    mask_tm = mask_tm.astype(jnp.float32)[:, :, None]                # (T, B_pad, 1)

    h0 = jnp.pad(post_hidden_state.astype(jnp.float32),
                 ((0, B_pad - B), (0, H_pad - H)))                   # (B_pad, H_pad)

    # -- weights: per-gate zero-padding to H_pad lanes (vreg-aligned gate
    # slices); r/z biases folded into the hoisted input projection; matmul
    # operands cast to matmul_dtype, biases kept f32.
    def pad_gate_cols(w):                                            # (..., 3H) -> (..., 3Hp)
        pad = [(0, 0)] * (w.ndim - 1) + [(0, H_pad - H)]
        return jnp.concatenate([jnp.pad(w[..., 0:H], pad),
                                jnp.pad(w[..., H:2 * H], pad),
                                jnp.pad(w[..., 2 * H:3 * H], pad)], axis=-1)

    f32 = lambda a: jnp.asarray(a, jnp.float32)
    w_ih = pad_gate_cols(f32(params["w_ih"]))                                     # (D_in, 3Hp)
    w_ih = jnp.pad(w_ih, ((0, D_pad - D_in), (0, 0))).astype(matmul_dtype)        # (Dp, 3Hp)
    w_hh = pad_gate_cols(jnp.pad(f32(params["w_hh"]),
                                 ((0, H_pad - H), (0, 0)))).astype(matmul_dtype)  # (Hp, 3Hp)
    b_ih = f32(params["b_ih"]).reshape(1, 3 * H)
    b_hh = f32(params["b_hh"]).reshape(1, 3 * H)
    bi = pad_gate_cols(jnp.concatenate(
        [b_ih[:, :2 * H] + b_hh[:, :2 * H], b_ih[:, 2 * H:]], axis=-1))           # (1, 3Hp)
    bhn = jnp.pad(b_hh[:, 2 * H:], ((0, 0), (0, H_pad - H)))                      # (1, Hp)
    w_out = jnp.pad(f32(params["w_out"]),
                    ((0, H_pad - H), (0, V_pad - V))).astype(matmul_dtype)        # (Hp, Vp)
    b_out = jnp.pad(f32(params["b_out"]).reshape(1, V),
                    ((0, 0), (0, V_pad - V)), constant_values=NEG)                # (1, Vp)

    cparams = pltpu.CompilerParams(dimension_semantics=("parallel",),
                                   vmem_limit_bytes=32 * 1024 * 1024)

    # ---- Kernel A: input projection + GRU recurrence, grid over batch blocks.
    Bb = _pick_batch_block(B_pad, T, D_pad, H_pad)
    nb = B_pad // Bb
    hs_tm = pl.pallas_call(
        gru_kernel,
        out_shape=jax.ShapeDtypeStruct((T, B_pad, H_pad), matmul_dtype),
        grid=(nb,),
        in_specs=[
            pl.BlockSpec((T, Bb, D_pad), lambda b: (0, b, 0)),        # x (time-major)
            pl.BlockSpec((T, Bb, 1), lambda b: (0, b, 0)),            # length mask
            pl.BlockSpec((Bb, H_pad), lambda b: (b, 0)),              # h0
            pl.BlockSpec((D_pad, 3 * H_pad), lambda b: (0, 0)),       # W_ih (resident)
            pl.BlockSpec((H_pad, 3 * H_pad), lambda b: (0, 0)),       # W_hh (resident)
            pl.BlockSpec((1, 3 * H_pad), lambda b: (0, 0)),           # folded biases
            pl.BlockSpec((1, H_pad), lambda b: (0, 0)),               # b_hn
        ],
        out_specs=pl.BlockSpec((T, Bb, H_pad), lambda b: (0, b, 0)),
        scratch_shapes=[pltpu.VMEM((T, Bb, 3 * H_pad), jnp.float32),  # gi (time-major)
                        pltpu.VMEM((T, Bb, H_pad), jnp.float32)],     # hs (time-major)
        compiler_params=cparams,
    )(x_tm, mask_tm, h0, w_ih, w_hh, bi, bhn)

    # ---- Kernel B: projection + log_softmax, grid over (T*B) row blocks,
    # V kept whole per block so the row reductions stay local.
    rows = T * B_pad
    t_chunk = _pick_time_chunk(T, B_pad, V_pad)
    Rb = B_pad * t_chunk
    nr = rows // Rb
    hs2d = hs_tm.reshape(rows, H_pad)

    mm_bytes = jnp.dtype(matmul_dtype).itemsize
    cost = pl.CostEstimate(
        flops=2 * rows * H_pad * V_pad + 6 * rows * V_pad,
        transcendentals=rows * V_pad,
        bytes_accessed=(rows * (H_pad * mm_bytes + V_pad * 4)
                        + H_pad * V_pad * mm_bytes + V_pad * 4))

    out2d = pl.pallas_call(
        proj_logsoftmax_kernel,
        out_shape=jax.ShapeDtypeStruct((rows, V_pad), jnp.float32),
        grid=(nr,),
        in_specs=[pl.BlockSpec((Rb, H_pad), lambda r: (r, 0)),
                  pl.BlockSpec((H_pad, V_pad), lambda r: (0, 0)),     # W_out (resident)
                  pl.BlockSpec((1, V_pad), lambda r: (0, 0))],
        out_specs=pl.BlockSpec((Rb, V_pad), lambda r: (r, 0)),
        compiler_params=cparams,
        cost_estimate=cost,
    )(hs2d, w_out, b_out)

    # Single batch-major transpose + un-pad slice in the wrapper (slice first
    # so the transposed volume is minimal).  For very large V, fold this into
    # Kernel B's out BlockSpec instead of a wrapper pass.
    out_tm = out2d.reshape(T, B_pad, V_pad)[:, :B, :V]                # (T, B, V)
    return jnp.transpose(out_tm, (1, 0, 2))                          # (B, T, V)


# ---------------------------------------------------------------------------
# Pure-JAX reference (mirrors the PyTorch forward) for a correctness check
# ---------------------------------------------------------------------------
def decoder_reference(params, context_embedding, target_embedding, target_lengths,
                      post_hidden_state):
    B = target_embedding.shape[0]
    H = post_hidden_state.shape[1]
    t_out = int(np.max(np.asarray(target_lengths)))
    tgt = target_embedding[:, :t_out, :]
    ctx = jnp.broadcast_to(context_embedding[:, None, :],
                           (B, t_out, context_embedding.shape[-1]))
    x = jnp.concatenate([tgt, ctx], axis=-1)                          # (B, T, D_in)

    def step(h, inp):
        x_t, t = inp
        gi = x_t @ params["w_ih"] + params["b_ih"]
        gh = h @ params["w_hh"] + params["b_hh"]
        r = jax.nn.sigmoid(gi[:, 0:H] + gh[:, 0:H])
        z = jax.nn.sigmoid(gi[:, H:2 * H] + gh[:, H:2 * H])
        n = jnp.tanh(gi[:, 2 * H:] + r * gh[:, 2 * H:])
        h_new = (1.0 - z) * n + z * h
        valid = (t < jnp.asarray(target_lengths, jnp.int32))[:, None]
        return h_new, jnp.where(valid, h_new, 0.0)

    xs = (jnp.transpose(x, (1, 0, 2)), jnp.arange(t_out, dtype=jnp.int32))
    _, hs = lax.scan(step, post_hidden_state.astype(jnp.float32), xs)
    hs = jnp.transpose(hs, (1, 0, 2))                                 # (B, T, H)
    logits = hs @ params["w_out"] + params["b_out"]
    return jax.nn.log_softmax(logits, axis=-1)


# ---------------------------------------------------------------------------
# Main
# ---------------------------------------------------------------------------
if __name__ == "__main__":
    # Synthetic "options": utter_direction=1 so post_hidden matches GRU hidden size.
    total_words = 63                 # vocab projection -> total_words + 1 = 64
    word_embedding_size = 16
    turn_hidden_state = 16
    utter_hidden_state = 32
    utter_direction = 1

    H = utter_hidden_state * utter_direction            # dec_hidden_state = 32
    D_in = word_embedding_size + turn_hidden_state      # dec_input_size   = 32
    V = total_words + 1                                 # 64

    B, T = 2, 8
    target_lengths = np.array([8, 5], dtype=np.int32)

    key = jax.random.PRNGKey(0)
    ks = jax.random.split(key, 10)
    k_init = 1.0 / np.sqrt(H)

    def unif(k, shape):
        return jax.random.uniform(k, shape, jnp.float32, -k_init, k_init)

    # Weights stored transposed from PyTorch: (in_features, out_features).
    params = {
        "w_ih": unif(ks[0], (D_in, 3 * H)),
        "w_hh": unif(ks[1], (H, 3 * H)),
        "b_ih": unif(ks[2], (1, 3 * H)),
        "b_hh": unif(ks[3], (1, 3 * H)),
        "w_out": unif(ks[4], (H, V)),
        "b_out": unif(ks[5], (1, V)),
    }

    context_embedding = jax.random.normal(ks[6], (B, turn_hidden_state), jnp.float32)
    target_embedding = jax.random.normal(ks[7], (B, T, word_embedding_size), jnp.float32)
    post_hidden_state = jax.random.normal(ks[8], (B, H), jnp.float32)

    # f32 matmul path: tight semantic check against the reference.
    out_f32 = decoder_forward(params, context_embedding, target_embedding,
                              target_lengths, post_hidden_state,
                              matmul_dtype=jnp.float32)
    # bf16 matmul path (default, the v6e/v7x performance configuration).
    out_bf16 = decoder_forward(params, context_embedding, target_embedding,
                               target_lengths, post_hidden_state,
                               matmul_dtype=jnp.bfloat16)
    out_f32, out_bf16 = jax.block_until_ready((out_f32, out_bf16))

    ref = decoder_reference(params, context_embedding, target_embedding,
                            target_lengths, post_hidden_state)
    ref = jax.block_until_ready(ref)

    T_out = int(target_lengths.max())
    assert out_f32.shape == (B, T_out, V), out_f32.shape
    assert out_bf16.shape == (B, T_out, V), out_bf16.shape
    np.testing.assert_allclose(np.asarray(out_f32), np.asarray(ref),
                               atol=1e-4, rtol=1e-4)
    np.testing.assert_allclose(np.asarray(out_bf16), np.asarray(ref),
                               atol=5e-2, rtol=5e-2)

    print("KERNEL_OK")
</pallas_src>

<mosaic_0001>
module attributes {stable_mosaic.version = 11 : i64} {
  func.func @gru_kernel(%arg0: i32, %arg1: memref<8x8x128xf32, #tpu.memory_space<vmem>>, %arg2: memref<8x8x1xf32, #tpu.memory_space<vmem>>, %arg3: memref<8x128xf32, #tpu.memory_space<vmem>>, %arg4: memref<128x384xf32, #tpu.memory_space<vmem>>, %arg5: memref<128x384xf32, #tpu.memory_space<vmem>>, %arg6: memref<1x384xf32, #tpu.memory_space<vmem>>, %arg7: memref<1x128xf32, #tpu.memory_space<vmem>>, %arg8: memref<8x8x128xf32, #tpu.memory_space<vmem>>, %arg9: memref<8x8x384xf32, #tpu.memory_space<vmem>>, %arg10: memref<8x8x128xf32, #tpu.memory_space<vmem>>) attributes {dimension_semantics = [#tpu.dimension_semantics<parallel>], iteration_bounds = array<i64: 1>, scalar_prefetch = 0 : i64, scratch_operands = 2 : i64, tpu.core_type = #tpu.core_type<tc>, window_params = [{transform_indices = @transform_0, window_bounds = array<i64: 8, 8, 128>}, {transform_indices = @transform_1, window_bounds = array<i64: 8, 8, 1>}, {transform_indices = @transform_2, window_bounds = array<i64: 8, 128>}, {pipeline_mode = #tpu.pipeline_mode<synchronous>, transform_indices = @transform_3, window_bounds = array<i64: 128, 384>}, {pipeline_mode = #tpu.pipeline_mode<synchronous>, transform_indices = @transform_4, window_bounds = array<i64: 128, 384>}, {pipeline_mode = #tpu.pipeline_mode<synchronous>, transform_indices = @transform_5, window_bounds = array<i64: 1, 384>}, {pipeline_mode = #tpu.pipeline_mode<synchronous>, transform_indices = @transform_6, window_bounds = array<i64: 1, 128>}, {transform_indices = @transform_7, window_bounds = array<i64: 8, 8, 128>}]} {
    %c0 = arith.constant 0 : index
    %c0_0 = arith.constant 0 : index
    %c0_1 = arith.constant 0 : index
    %0 = vector.load %arg1[%c0, %c0_0, %c0_1] : memref<8x8x128xf32, #tpu.memory_space<vmem>>, vector<8x8x128xf32>
    %1 = vector.shape_cast %0 : vector<8x8x128xf32> to vector<64x128xf32>
    %c0_2 = arith.constant 0 : index
    %c0_3 = arith.constant 0 : index
    %2 = vector.load %arg4[%c0_2, %c0_3] : memref<128x384xf32, #tpu.memory_space<vmem>>, vector<128x384xf32>
    %cst = arith.constant dense<0.000000e+00> : vector<64x384xf32>
    %3 = tpu.matmul %1, %2, %cst {dimension_numbers = #tpu.dot_dimension_numbers<[1], [0], [0], [1], [0, 0, 1, 1], [], []>} : vector<64x128xf32>, vector<128x384xf32>, vector<64x384xf32> -> vector<64x384xf32>
    %c0_4 = arith.constant 0 : index
    %c0_5 = arith.constant 0 : index
    %4 = vector.load %arg6[%c0_4, %c0_5] : memref<1x384xf32, #tpu.memory_space<vmem>>, vector<1x384xf32>
    %5 = vector.broadcast %4 : vector<1x384xf32> to vector<64x384xf32>
    %6 = arith.addf %3, %5 : vector<64x384xf32>
    %7 = vector.shape_cast %6 : vector<64x384xf32> to vector<8x8x384xf32>
    %c0_6 = arith.constant 0 : index
    %c0_7 = arith.constant 0 : index
    %c0_8 = arith.constant 0 : index
    %8 = vector.load %arg9[%c0_6, %c0_7, %c0_8] : memref<8x8x384xf32, #tpu.memory_space<vmem>>, vector<8x8x384xf32>
    tpu.vector_store %arg9[%c0_6, %c0_7, %c0_8], %7 {strides = array<i32>} : memref<8x8x384xf32, #tpu.memory_space<vmem>>, vector<8x8x384xf32>,
    %c0_9 = arith.constant 0 : index
    %c0_10 = arith.constant 0 : index
    %9 = vector.load %arg5[%c0_9, %c0_10] : memref<128x384xf32, #tpu.memory_space<vmem>>, vector<128x384xf32>
    %c0_11 = arith.constant 0 : index
    %c0_12 = arith.constant 0 : index
    %10 = vector.load %arg7[%c0_11, %c0_12] : memref<1x128xf32, #tpu.memory_space<vmem>>, vector<1x128xf32>
    %c0_13 = arith.constant 0 : index
    %c0_14 = arith.constant 0 : index
    %11 = vector.load %arg3[%c0_13, %c0_14] : memref<8x128xf32, #tpu.memory_space<vmem>>, vector<8x128xf32>
    %c0_i32 = arith.constant 0 : i32
    %c8_i32 = arith.constant 8 : i32
    %12 = arith.addi %c0_i32, %c8_i32 : i32
    %c1_i32 = arith.constant 1 : i32
    %13 = scf.for %arg11 = %c0_i32 to %12 step %c1_i32 iter_args(%arg12 = %11) -> (vector<8x128xf32>)  : i32 {
      %19 = arith.index_cast %arg11 : i32 to index
      %c0_25 = arith.constant 0 : index
      %c0_26 = arith.constant 0 : index
      %20 = vector.load %arg9[%19, %c0_25, %c0_26] : memref<8x8x384xf32, #tpu.memory_space<vmem>>, vector<1x8x384xf32>
      %21 = vector.shape_cast %20 : vector<1x8x384xf32> to vector<8x384xf32>
      %cst_27 = arith.constant dense<0.000000e+00> : vector<8x384xf32>
      %22 = tpu.matmul %arg12, %9, %cst_27 {dimension_numbers = #tpu.dot_dimension_numbers<[1], [0], [0], [1], [0, 0, 1, 1], [], []>} : vector<8x128xf32>, vector<128x384xf32>, vector<8x384xf32> -> vector<8x384xf32>
      %23 = vector.extract_strided_slice %21 {offsets = [0, 0], sizes = [8, 128], strides = [1, 1]} : vector<8x384xf32> to vector<8x128xf32>
      %24 = vector.extract_strided_slice %22 {offsets = [0, 0], sizes = [8, 128], strides = [1, 1]} : vector<8x384xf32> to vector<8x128xf32>
      %25 = arith.addf %23, %24 : vector<8x128xf32>
      %26 = arith.negf %25 : vector<8x128xf32>
      %27 = math.exp %26 : vector<8x128xf32>
      %cst_28 = arith.constant 1.000000e+00 : f32
      %28 = vector.broadcast %cst_28 : f32 to vector<8x128xf32>
      %29 = arith.addf %28, %27 : vector<8x128xf32>
      %30 = arith.divf %28, %29 : vector<8x128xf32>
      %31 = vector.extract_strided_slice %21 {offsets = [0, 128], sizes = [8, 128], strides = [1, 1]} : vector<8x384xf32> to vector<8x128xf32>
      %32 = vector.extract_strided_slice %22 {offsets = [0, 128], sizes = [8, 128], strides = [1, 1]} : vector<8x384xf32> to vector<8x128xf32>
      %33 = arith.addf %31, %32 : vector<8x128xf32>
      %34 = arith.negf %33 : vector<8x128xf32>
      %35 = math.exp %34 : vector<8x128xf32>
      %cst_29 = arith.constant 1.000000e+00 : f32
      %36 = vector.broadcast %cst_29 : f32 to vector<8x128xf32>
      %37 = arith.addf %36, %35 : vector<8x128xf32>
      %38 = arith.divf %36, %37 : vector<8x128xf32>
      %39 = vector.extract_strided_slice %21 {offsets = [0, 256], sizes = [8, 128], strides = [1, 1]} : vector<8x384xf32> to vector<8x128xf32>
      %40 = vector.extract_strided_slice %22 {offsets = [0, 256], sizes = [8, 128], strides = [1, 1]} : vector<8x384xf32> to vector<8x128xf32>
      %41 = vector.broadcast %10 : vector<1x128xf32> to vector<8x128xf32>
      %42 = arith.addf %40, %41 : vector<8x128xf32>
      %43 = arith.mulf %30, %42 : vector<8x128xf32>
      %44 = arith.addf %39, %43 : vector<8x128xf32>
      %45 = math.tanh %44 : vector<8x128xf32>
      %cst_30 = arith.constant 1.000000e+00 : f32
      %46 = vector.broadcast %cst_30 : f32 to vector<8x128xf32>
      %47 = arith.subf %46, %38 : vector<8x128xf32>
      %48 = arith.mulf %47, %45 : vector<8x128xf32>
      %49 = arith.mulf %38, %arg12 : vector<8x128xf32>
      %50 = arith.addf %48, %49 : vector<8x128xf32>
      %51 = arith.index_cast %arg11 : i32 to index
      %c0_31 = arith.constant 0 : index
      %c0_32 = arith.constant 0 : index
      %52 = vector.load %arg10[%51, %c0_31, %c0_32] : memref<8x8x128xf32, #tpu.memory_space<vmem>>, vector<1x8x128xf32>
      %53 = vector.shape_cast %52 : vector<1x8x128xf32> to vector<8x128xf32>
      %54 = vector.shape_cast %50 : vector<8x128xf32> to vector<1x8x128xf32>
      tpu.vector_store %arg10[%51, %c0_31, %c0_32], %54 {strides = array<i32>} : memref<8x8x128xf32, #tpu.memory_space<vmem>>, vector<1x8x128xf32>,
      scf.yield %50 : vector<8x128xf32>
    }
    %c8_i32_15 = arith.constant 8 : i32
    %c0_16 = arith.constant 0 : index
    %c0_17 = arith.constant 0 : index
    %c0_18 = arith.constant 0 : index
    %14 = vector.load %arg10[%c0_16, %c0_17, %c0_18] : memref<8x8x128xf32, #tpu.memory_space<vmem>>, vector<8x8x128xf32>
    %c0_19 = arith.constant 0 : index
    %c0_20 = arith.constant 0 : index
    %c0_21 = arith.constant 0 : index
    %15 = vector.load %arg2[%c0_19, %c0_20, %c0_21] : memref<8x8x1xf32, #tpu.memory_space<vmem>>, vector<8x8x1xf32>
    %16 = vector.broadcast %15 : vector<8x8x1xf32> to vector<8x8x128xf32>
    %17 = arith.mulf %14, %16 : vector<8x8x128xf32>
    %c0_22 = arith.constant 0 : index
    %c0_23 = arith.constant 0 : index
    %c0_24 = arith.constant 0 : index
    %18 = vector.load %arg8[%c0_22, %c0_23, %c0_24] : memref<8x8x128xf32, #tpu.memory_space<vmem>>, vector<8x8x128xf32>
    tpu.vector_store %arg8[%c0_22, %c0_23, %c0_24], %17 {strides = array<i32>} : memref<8x8x128xf32, #tpu.memory_space<vmem>>, vector<8x8x128xf32>,
    return
  }
  func.func @transform_0(%arg0: i32) -> (i32, i32, i32) {
    %c0_i32 = arith.constant 0 : i32
    %c0_i32_0 = arith.constant 0 : i32
    %c0_i32_1 = arith.constant 0 : i32
    return %c0_i32, %arg0, %c0_i32_0 : i32, i32, i32
  }
  func.func @transform_1(%arg0: i32) -> (i32, i32, i32) {
    %c0_i32 = arith.constant 0 : i32
    %c0_i32_0 = arith.constant 0 : i32
    %c0_i32_1 = arith.constant 0 : i32
    return %c0_i32, %arg0, %c0_i32_0 : i32, i32, i32
  }
  func.func @transform_2(%arg0: i32) -> (i32, i32) {
    %c0_i32 = arith.constant 0 : i32
    %c0_i32_0 = arith.constant 0 : i32
    return %arg0, %c0_i32 : i32, i32
  }
  func.func @transform_3(%arg0: i32) -> (i32, i32) {
    %c0_i32 = arith.constant 0 : i32
    %c0_i32_0 = arith.constant 0 : i32
    %c0_i32_1 = arith.constant 0 : i32
    return %c0_i32, %c0_i32_0 : i32, i32
  }
  func.func @transform_4(%arg0: i32) -> (i32, i32) {
    %c0_i32 = arith.constant 0 : i32
    %c0_i32_0 = arith.constant 0 : i32
    %c0_i32_1 = arith.constant 0 : i32
    return %c0_i32, %c0_i32_0 : i32, i32
  }
  func.func @transform_5(%arg0: i32) -> (i32, i32) {
    %c0_i32 = arith.constant 0 : i32
    %c0_i32_0 = arith.constant 0 : i32
    %c0_i32_1 = arith.constant 0 : i32
    return %c0_i32, %c0_i32_0 : i32, i32
  }
  func.func @transform_6(%arg0: i32) -> (i32, i32) {
    %c0_i32 = arith.constant 0 : i32
    %c0_i32_0 = arith.constant 0 : i32
    %c0_i32_1 = arith.constant 0 : i32
    return %c0_i32, %c0_i32_0 : i32, i32
  }
  func.func @transform_7(%arg0: i32) -> (i32, i32, i32) {
    %c0_i32 = arith.constant 0 : i32
    %c0_i32_0 = arith.constant 0 : i32
    %c0_i32_1 = arith.constant 0 : i32
    return %c0_i32, %arg0, %c0_i32_0 : i32, i32, i32
  }
}

</mosaic_0001>

<llo_original>
// kernel: tpu_custom_call.1
$region0: #{tpu_custom_call.1}
  #allocation0 [shape = 'u32[]', space=smem, size = 0x4, offset = 0x4, fixed_abs, tag = 'smem constant byte address 0x4 - core index']
  #allocation1 [shape = 'u32[144,128]{1,0:T(1,128)}', space=vmem, size = 0x12000, scoped, tag = 'internal scratch']
  #allocation2 [shape = 'f32[8,8,384]{2,1,0:T(8,128)}', space=vmem, size = 0x18000, scoped, tag = 'scratch operand']
  #allocation3 [shape = 'f32[8,8,128]{2,1,0:T(8,128)}', space=vmem, size = 0x8000, scoped, tag = 'scratch operand']
  %s0 = inlined_call_operand.vmem [shape: f32[8,8,128], index: 0, kind: input, shape index: {}]
  %s1 = inlined_call_operand.vmem [shape: f32[8,8,1], index: 1, kind: input, shape index: {}]
  %s2 = inlined_call_operand.vmem [shape: f32[8,128], index: 2, kind: input, shape index: {}]
  %s3 = inlined_call_operand.hbm [shape: f32[128,384], index: 3, kind: input, shape index: {}]
  %s4 = inlined_call_operand.hbm [shape: f32[128,384], index: 4, kind: input, shape index: {}]
  %s5 = inlined_call_operand.vmem [shape: f32[1,384], index: 5, kind: input, shape index: {}]
  %s6 = inlined_call_operand.vmem [shape: f32[1,128], index: 6, kind: input, shape index: {}]
  %s7 = inlined_call_operand.hbm [shape: f32[8,8,128], index: 7, kind: output, shape index: {}]
  %s8 = sld [smem:[#allocation0]]
  $region53: #{tpu_custom_call.1} parent=0
    _
  %s10 = ssub.s32 1, %s8
  %s11 = scalar_select 0, %s10, %s8
  $region1: #{tpu_custom_call.1} parent=0
    #allocation4 [shape = 'u8[196608]{0}', space=vmem, size = 0x30000, scoped, tag = 'input window, operand 3, single buffered']
    #allocation5 [shape = 's32[1]{0}', space=sflag, size = 0x4, scoped, tag = 'scoped memory for tpu_custom_call.1']
    #allocation6 [shape = 's32[1]{0}', space=sflag, size = 0x4, scoped, tag = 'scoped memory for tpu_custom_call.1']
    #allocation7 [shape = 'u8[196608]{0}', space=vmem, size = 0x30000, scoped, tag = 'input window, operand 4, single buffered']
    #allocation8 [shape = 's32[1]{0}', space=sflag, size = 0x4, scoped, tag = 'scoped memory for tpu_custom_call.1']
    #allocation9 [shape = 'u8[32768]{0}', space=vmem, size = 0x8000, scoped, tag = 'output window, operand 0, single buffered']
    %12 = vsyncpa [#allocation5], 0
    %13 = vsyncpa [#allocation8], 0
    %14 = vsyncpa [#allocation6], 0
    // Predicated region
    $region2: #{tpu_custom_call.1} parent=1 // pred_check
      _
    $region3: #{tpu_custom_call.1} parent=1 // pred_check_branch
      %16 = sbr.rel (0) target = $region5
    $region4: #{tpu_custom_call.1} parent=1 // pred_region
      _
    $region5: #{tpu_custom_call.1} parent=1 // pred_fallthru
      _
    // Predicated region
    $region6: #{tpu_custom_call.1} parent=1 // pred_check
      _
    $region7: #{tpu_custom_call.1} parent=1 // pred_check_branch
      %18 = sbr.rel (0) target = $region9
    $region8: #{tpu_custom_call.1} parent=1 // pred_region
      _
    $region9: #{tpu_custom_call.1} parent=1 // pred_fallthru
      _
    // Predicated region
    $region10: #{tpu_custom_call.1} parent=1 // pred_check
      _
    $region11: #{tpu_custom_call.1} parent=1 // pred_check_branch
      %20 = sbr.rel (0) target = $region13
    $region12: #{tpu_custom_call.1} parent=1 // pred_region
      _
    $region13: #{tpu_custom_call.1} parent=1 // pred_fallthru
      _
    // Predicated region
    $region14: #{tpu_custom_call.1} parent=1 // pred_check
      _
    $region15: #{tpu_custom_call.1} parent=1 // pred_check_branch
      %22 = sbr.rel (0) target = $region17
    $region16: #{tpu_custom_call.1} parent=1 // pred_region
      %s24 = ssub.s32 6144, 6144
      %25 = vsyncadd [#allocation5], %s24
      %s26 = sshll.u32 [#allocation4], 4
      %s27 = int_to_ptr.vmem [resolvable:$true] %s26
      %32 = dma.hbm_to_vmem [thread:$0]  %s3, 6144, %s27, [#allocation5], 384, 384, 24
    $region17: #{tpu_custom_call.1} parent=1 // pred_fallthru
      _
    // Predicated region
    $region18: #{tpu_custom_call.1} parent=1 // pred_check
      _
    $region19: #{tpu_custom_call.1} parent=1 // pred_check_branch
      %34 = sbr.rel (0) target = $region21
    $region20: #{tpu_custom_call.1} parent=1 // pred_region
      %s36 = ssub.s32 6144, 6144
      %37 = vsyncadd [#allocation8], %s36
      %s38 = sshll.u32 [#allocation7], 4
      %s39 = int_to_ptr.vmem [resolvable:$true] %s38
      %44 = dma.hbm_to_vmem [thread:$0]  %s4, 6144, %s39, [#allocation8], 384, 384, 24
    $region21: #{tpu_custom_call.1} parent=1 // pred_fallthru
      _
    // Predicated region
    $region22: #{tpu_custom_call.1} parent=1 // pred_check
      _
    $region23: #{tpu_custom_call.1} parent=1 // pred_check_branch
      %46 = sbr.rel (0) target = $region25
    $region24: #{tpu_custom_call.1} parent=1 // pred_region
      _
    $region25: #{tpu_custom_call.1} parent=1 // pred_fallthru
      _
    // Predicated region
    $region26: #{tpu_custom_call.1} parent=1 // pred_check
      _
    $region27: #{tpu_custom_call.1} parent=1 // pred_check_branch
      %48 = sbr.rel (0) target = $region29
    $region28: #{tpu_custom_call.1} parent=1 // pred_region
      _
    $region29: #{tpu_custom_call.1} parent=1 // pred_fallthru
      _
    // Predicated region
    $region30: #{tpu_custom_call.1} parent=1 // pred_check
      _
    $region31: #{tpu_custom_call.1} parent=1 // pred_check_branch
      %50 = sbr.rel (0) target = $region33
    $region32: #{tpu_custom_call.1} parent=1 // pred_region
      %51 = dma.done [#allocation5], 6144
    $region33: #{tpu_custom_call.1} parent=1 // pred_fallthru
      _
    // Predicated region
    $region34: #{tpu_custom_call.1} parent=1 // pred_check
      _
    $region35: #{tpu_custom_call.1} parent=1 // pred_check_branch
      %53 = sbr.rel (0) target = $region37
    $region36: #{tpu_custom_call.1} parent=1 // pred_region
      %54 = dma.done [#allocation8], 6144
    $region37: #{tpu_custom_call.1} parent=1 // pred_fallthru
      _
    %v55 = vld [vmem:[%s0] sm:$0xff]
    %v56 = vld [vmem:[%s0 + $0x8] sm:$0xff]
    %v57 = vld [vmem:[%s0 + $0x10] sm:$0xff]
    %v58 = vld [vmem:[%s0 + $0x18] sm:$0xff]
    %v59 = vld [vmem:[%s0 + $0x20] sm:$0xff]
    %v60 = vld [vmem:[%s0 + $0x28] sm:$0xff]
    %v61 = vld [vmem:[%s0 + $0x30] sm:$0xff]
    %v62 = vld [vmem:[%s0 + $0x38] sm:$0xff]
    %v63 = vld [vmem:[#allocation4] sm:$0xff]
    %v64 = vld [vmem:[#allocation4 + $0x8] sm:$0xff]
    %v65 = vld [vmem:[#allocation4 + $0x10] sm:$0xff]
    %v66 = vld [vmem:[#allocation4 + $0x18] sm:$0xff]
    %v67 = vld [vmem:[#allocation4 + $0x20] sm:$0xff]
    %v68 = vld [vmem:[#allocation4 + $0x28] sm:$0xff]
    %v69 = vld [vmem:[#allocation4 + $0x30] sm:$0xff]
    %v70 = vld [vmem:[#allocation4 + $0x38] sm:$0xff]
    %v71 = vld [vmem:[#allocation4 + $0x40] sm:$0xff]
    %v72 = vld [vmem:[#allocation4 + $0x48] sm:$0xff]
    %v73 = vld [vmem:[#allocation4 + $0x50] sm:$0xff]
    %v74 = vld [vmem:[#allocation4 + $0x58] sm:$0xff]
    %v75 = vld [vmem:[#allocation4 + $0x60] sm:$0xff]
    %v76 = vld [vmem:[#allocation4 + $0x68] sm:$0xff]
    %v77 = vld [vmem:[#allocation4 + $0x70] sm:$0xff]
    %v78 = vld [vmem:[#allocation4 + $0x78] sm:$0xff]
    %v79 = vld [vmem:[#allocation4 + $0x80] sm:$0xff]
    %v80 = vld [vmem:[#allocation4 + $0x88] sm:$0xff]
    %v81 = vld [vmem:[#allocation4 + $0x90] sm:$0xff]
    %v82 = vld [vmem:[#allocation4 + $0x98] sm:$0xff]
    %v83 = vld [vmem:[#allocation4 + $0xa0] sm:$0xff]
    %v84 = vld [vmem:[#allocation4 + $0xa8] sm:$0xff]
    %v85 = vld [vmem:[#allocation4 + $0xb0] sm:$0xff]
    %v86 = vld [vmem:[#allocation4 + $0xb8] sm:$0xff]
    %v87 = vld [vmem:[#allocation4 + $0xc0] sm:$0xff]
    %v88 = vld [vmem:[#allocation4 + $0xc8] sm:$0xff]
    %v89 = vld [vmem:[#allocation4 + $0xd0] sm:$0xff]
    %v90 = vld [vmem:[#allocation4 + $0xd8] sm:$0xff]
    %v91 = vld [vmem:[#allocation4 + $0xe0] sm:$0xff]
    %v92 = vld [vmem:[#allocation4 + $0xe8] sm:$0xff]
    %v93 = vld [vmem:[#allocation4 + $0xf0] sm:$0xff]
    %v94 = vld [vmem:[#allocation4 + $0xf8] sm:$0xff]
    %v95 = vld [vmem:[#allocation4 + $0x100] sm:$0xff]
    %v96 = vld [vmem:[#allocation4 + $0x108] sm:$0xff]
    %v97 = vld [vmem:[#allocation4 + $0x110] sm:$0xff]
    %v98 = vld [vmem:[#allocation4 + $0x118] sm:$0xff]
    %v99 = vld [vmem:[#allocation4 + $0x120] sm:$0xff]
    %v100 = vld [vmem:[#allocation4 + $0x128] sm:$0xff]
    %v101 = vld [vmem:[#allocation4 + $0x130] sm:$0xff]
    %v102 = vld [vmem:[#allocation4 + $0x138] sm:$0xff]
    %v103 = vld [vmem:[#allocation4 + $0x140] sm:$0xff]
    %v104 = vld [vmem:[#allocation4 + $0x148] sm:$0xff]
    %v105 = vld [vmem:[#allocation4 + $0x150] sm:$0xff]
    %v106 = vld [vmem:[#allocation4 + $0x158] sm:$0xff]
    %v107 = vld [vmem:[#allocation4 + $0x160] sm:$0xff]
    %v108 = vld [vmem:[#allocation4 + $0x168] sm:$0xff]
    %v109 = vld [vmem:[#allocation4 + $0x170] sm:$0xff]
    %v110 = vld [vmem:[#allocation4 + $0x178] sm:$0xff]
    %v111 = vld [vmem:[%s5] sm:$0x7]
    %v113 = vlaneseq
    %v114 = vshrl.u32 %v113, 7
    %v115 = vsub.s32 0, %v114
    %v116 = vrot.slane %v111, %v115
    %v117 = vlaneseq
    %v118 = vshrl.u32 %v117, 7
    %v119 = vsub.s32 1, %v118
    %v120 = vrot.slane %v111, %v119
    %v121 = vlaneseq
    %v122 = vshrl.u32 %v121, 7
    %v123 = vsub.s32 2, %v122
    %v124 = vrot.slane %v111, %v123
    %128 = vmatprep.subr.mxu0 %v64
    %129 = vmatpush1.msra.mxu0 %v63
    %130 = vmatprep.subr.mxu0 %v67
    %131 = vmatpush1.msra.mxu0 %v66
    %132 = vmatprep.subr.mxu0 %v70
    %133 = vmatpush1.msra.mxu0 %v69
    %134 = vmatprep.subr.mxu0 %v73
    %135 = vmatpush1.msra.mxu0 %v72
    %136 = vmatprep.subr.mxu0 %v76
    %137 = vmatpush1.msra.mxu0 %v75
    %138 = vmatprep.subr.mxu0 %v79
    %139 = vmatpush1.msra.mxu0 %v78
    %140 = vmatprep.subr.mxu0 %v82
    %141 = vmatpush1.msra.mxu0 %v81
    %142 = vmatprep.subr.mxu0 %v85
    %143 = vmatpush1.msra.mxu0 %v84
    %144 = vmatprep.subr.mxu0 %v88
    %145 = vmatpush1.msra.mxu0 %v87
    %146 = vmatprep.subr.mxu0 %v91
    %147 = vmatpush1.msra.mxu0 %v90
    %148 = vmatprep.subr.mxu0 %v94
    %149 = vmatpush1.msra.mxu0 %v93
    %150 = vmatprep.subr.mxu0 %v97
    %151 = vmatpush1.msra.mxu0 %v96
    %152 = vmatprep.subr.mxu0 %v100
    %153 = vmatpush1.msra.mxu0 %v99
    %154 = vmatprep.subr.mxu0 %v103
    %155 = vmatpush1.msra.mxu0 %v102
    %156 = vmatprep.subr.mxu0 %v106
    %157 = vmatpush1.msra.mxu0 %v105
    %158 = vmatprep.subr.mxu0 %v109
    %159 = vmatpush1.msra.mxu0 %v108
    %160 = vmatprep.subr.mxu0 0.0
    %161 = vmatpush1.msra.mxu0 0.0
    %162 = vmatprep.subr.mxu0 0.0
    %163 = vmatpush1.msra.mxu0 0.0
    %164 = vmatprep.subr.mxu0 0.0
    %165 = vmatpush1.msra.mxu0 0.0
    %166 = vmatprep.subr.mxu0 0.0
    %167 = vmatpush1.msra.mxu0 0.0
    %168 = vmatprep.subr.mxu0 0.0
    %169 = vmatpush1.msra.mxu0 0.0
    %170 = vmatprep.subr.mxu0 0.0
    %171 = vmatpush1.msra.mxu0 0.0
    %172 = vmatprep.subr.mxu0 0.0
    %173 = vmatpush1.msra.mxu0 0.0
    %174 = vmatprep.subr.mxu0 0.0
    %175 = vmatpush1.msra.mxu0 0.0
    %176 = vmatprep.subr.mxu0 0.0
    %177 = vmatpush1.msra.mxu0 0.0
    %178 = vmatprep.subr.mxu0 0.0
    %179 = vmatpush1.msra.mxu0 0.0
    %180 = vmatprep.subr.mxu0 0.0
    %181 = vmatpush1.msra.mxu0 0.0
    %182 = vmatprep.subr.mxu0 0.0
    %183 = vmatpush1.msra.mxu0 0.0
    %184 = vmatprep.subr.mxu0 0.0
    %185 = vmatpush1.msra.mxu0 0.0
    %186 = vmatprep.subr.mxu0 0.0
    %187 = vmatpush1.msra.mxu0 0.0
    %188 = vmatprep.subr.mxu0 0.0
    %189 = vmatpush1.msra.mxu0 0.0
    %190 = vmatprep.subr.mxu0 0.0
    %191 = vmatpush1.msra.mxu0 0.0
    %192 = vmatprep.mubr.f32.mxu0 0.0
    %193 = vmatmul.mubr.f32.gmra.mrb[0].mxu0 %v55
    %v194 = vpop.f32.mrb[0].mxu0
    %v195 = vadd.f32 %v116, %v194
    %v196 = vpop.f32.mrb[0].mxu0
    %v197 = vadd.f32 %v120, %v196
    %198 = vmatprep.mubr.f32.mxu0 0.0
    %199 = vmatmul.mubr.f32.gmra.mrb[0].mxu0 %v56
    %v200 = vpop.f32.mrb[0].mxu0
    %v201 = vadd.f32 %v116, %v200
    %v202 = vpop.f32.mrb[0].mxu0
    %v203 = vadd.f32 %v120, %v202
    %204 = vmatprep.mubr.f32.mxu0 0.0
    %205 = vmatmul.mubr.f32.gmra.mrb[0].mxu0 %v57
    %v206 = vpop.f32.mrb[0].mxu0
    %v207 = vadd.f32 %v116, %v206
    %v208 = vpop.f32.mrb[0].mxu0
    %v209 = vadd.f32 %v120, %v208
    %210 = vmatprep.mubr.f32.mxu0 0.0
    %211 = vmatmul.mubr.f32.gmra.mrb[0].mxu0 %v58
    %v212 = vpop.f32.mrb[0].mxu0
    %v213 = vadd.f32 %v116, %v212
    %v214 = vpop.f32.mrb[0].mxu0
    %v215 = vadd.f32 %v120, %v214
    %216 = vmatprep.mubr.f32.mxu0 0.0
    %217 = vmatmul.mubr.f32.gmra.mrb[0].mxu0 %v59
    %v218 = vpop.f32.mrb[0].mxu0
    %v219 = vadd.f32 %v116, %v218
    %v220 = vpop.f32.mrb[0].mxu0
    %v221 = vadd.f32 %v120, %v220
    %222 = vmatprep.mubr.f32.mxu0 0.0
    %223 = vmatmul.mubr.f32.gmra.mrb[0].mxu0 %v60
    %v224 = vpop.f32.mrb[0].mxu0
    %v225 = vadd.f32 %v116, %v224
    %v226 = vpop.f32.mrb[0].mxu0
    %v227 = vadd.f32 %v120, %v226
    %228 = vmatprep.mubr.f32.mxu0 0.0
    %229 = vmatmul.mubr.f32.gmra.mrb[0].mxu0 %v61
    %v230 = vpop.f32.mrb[0].mxu0
    %v231 = vadd.f32 %v116, %v230
    %v232 = vpop.f32.mrb[0].mxu0
    %v233 = vadd.f32 %v120, %v232
    %234 = vmatprep.mubr.f32.mxu0 0.0
    %235 = vmatmul.mubr.f32.gmra.mrb[0].mxu0 %v62
    %v236 = vpop.f32.mrb[0].mxu0
    %v237 = vadd.f32 %v116, %v236
    %v238 = vpop.f32.mrb[0].mxu0
    %v239 = vadd.f32 %v120, %v238
    %240 = vdwg.mxu0
    %241 = vmatprep.subr.mxu0 0.0
    %242 = vmatpush1.msra.mxu0 %v65
    %243 = vmatprep.subr.mxu0 0.0
    %244 = vmatpush1.msra.mxu0 %v68
    %245 = vmatprep.subr.mxu0 0.0
    %246 = vmatpush1.msra.mxu0 %v71
    %247 = vmatprep.subr.mxu0 0.0
    %248 = vmatpush1.msra.mxu0 %v74
    %249 = vmatprep.subr.mxu0 0.0
    %250 = vmatpush1.msra.mxu0 %v77
    %251 = vmatprep.subr.mxu0 0.0
    %252 = vmatpush1.msra.mxu0 %v80
    %253 = vmatprep.subr.mxu0 0.0
    %254 = vmatpush1.msra.mxu0 %v83
    %255 = vmatprep.subr.mxu0 0.0
    %256 = vmatpush1.msra.mxu0 %v86
    %257 = vmatprep.subr.mxu0 0.0
    %258 = vmatpush1.msra.mxu0 %v89
    %259 = vmatprep.subr.mxu0 0.0
    %260 = vmatpush1.msra.mxu0 %v92
    %261 = vmatprep.subr.mxu0 0.0
    %262 = vmatpush1.msra.mxu0 %v95
    %263 = vmatprep.subr.mxu0 0.0
    %264 = vmatpush1.msra.mxu0 %v98
    %265 = vmatprep.subr.mxu0 0.0
    %266 = vmatpush1.msra.mxu0 %v101
    %267 = vmatprep.subr.mxu0 0.0
    %268 = vmatpush1.msra.mxu0 %v104
    %269 = vmatprep.subr.mxu0 0.0
    %270 = vmatpush1.msra.mxu0 %v107
    %271 = vmatprep.subr.mxu0 0.0
    %272 = vmatpush1.msra.mxu0 %v110
    %273 = vmatprep.subr.mxu0 0.0
    %274 = vmatpush1.msra.mxu0 0.0
    %275 = vmatprep.subr.mxu0 0.0
    %276 = vmatpush1.msra.mxu0 0.0
    %277 = vmatprep.subr.mxu0 0.0
    %278 = vmatpush1.msra.mxu0 0.0
    %279 = vmatprep.subr.mxu0 0.0
    %280 = vmatpush1.msra.mxu0 0.0
    %281 = vmatprep.subr.mxu0 0.0
    %282 = vmatpush1.msra.mxu0 0.0
    %283 = vmatprep.subr.mxu0 0.0
    %284 = vmatpush1.msra.mxu0 0.0
    %285 = vmatprep.subr.mxu0 0.0
    %286 = vmatpush1.msra.mxu0 0.0
    %287 = vmatprep.subr.mxu0 0.0
    %288 = vmatpush1.msra.mxu0 0.0
    %289 = vmatprep.subr.mxu0 0.0
    %290 = vmatpush1.msra.mxu0 0.0
    %291 = vmatprep.subr.mxu0 0.0
    %292 = vmatpush1.msra.mxu0 0.0
    %293 = vmatprep.subr.mxu0 0.0
    %294 = vmatpush1.msra.mxu0 0.0
    %295 = vmatprep.subr.mxu0 0.0
    %296 = vmatpush1.msra.mxu0 0.0
    %297 = vmatprep.subr.mxu0 0.0
    %298 = vmatpush1.msra.mxu0 0.0
    %299 = vmatprep.subr.mxu0 0.0
    %300 = vmatpush1.msra.mxu0 0.0
    %301 = vmatprep.subr.mxu0 0.0
    %302 = vmatpush1.msra.mxu0 0.0
    %303 = vmatprep.subr.mxu0 0.0
    %304 = vmatpush1.msra.mxu0 0.0
    %305 = vmatprep.mubr.f32.mxu0 0.0
    %306 = vmatmul.mubr.f32.gmra.mrb[0].mxu0 %v55
    %v307 = vpop.f32.mrb[0].mxu0
    %v308 = vadd.f32 %v124, %v307
    %v309 = vpop.f32.mrb[0].mxu0
    %310 = vmatprep.mubr.f32.mxu0 0.0
    %311 = vmatmul.mubr.f32.gmra.mrb[0].mxu0 %v56
    %v312 = vpop.f32.mrb[0].mxu0
    %v313 = vadd.f32 %v124, %v312
    %v314 = vpop.f32.mrb[0].mxu0
    %315 = vmatprep.mubr.f32.mxu0 0.0
    %316 = vmatmul.mubr.f32.gmra.mrb[0].mxu0 %v57
    %v317 = vpop.f32.mrb[0].mxu0
    %v318 = vadd.f32 %v124, %v317
    %v319 = vpop.f32.mrb[0].mxu0
    %320 = vmatprep.mubr.f32.mxu0 0.0
    %321 = vmatmul.mubr.f32.gmra.mrb[0].mxu0 %v58
    %v322 = vpop.f32.mrb[0].mxu0
    %v323 = vadd.f32 %v124, %v322
    %v324 = vpop.f32.mrb[0].mxu0
    %325 = vmatprep.mubr.f32.mxu0 0.0
    %326 = vmatmul.mubr.f32.gmra.mrb[0].mxu0 %v59
    %v327 = vpop.f32.mrb[0].mxu0
    %v328 = vadd.f32 %v124, %v327
    %v329 = vpop.f32.mrb[0].mxu0
    %330 = vmatprep.mubr.f32.mxu0 0.0
    %331 = vmatmul.mubr.f32.gmra.mrb[0].mxu0 %v60
    %v332 = vpop.f32.mrb[0].mxu0
    %v333 = vadd.f32 %v124, %v332
    %v334 = vpop.f32.mrb[0].mxu0
    %335 = vmatprep.mubr.f32.mxu0 0.0
    %336 = vmatmul.mubr.f32.gmra.mrb[0].mxu0 %v61
    %v337 = vpop.f32.mrb[0].mxu0
    %v338 = vadd.f32 %v124, %v337
    %v339 = vpop.f32.mrb[0].mxu0
    %340 = vmatprep.mubr.f32.mxu0 0.0
    %341 = vmatmul.mubr.f32.gmra.mrb[0].mxu0 %v62
    %v342 = vpop.f32.mrb[0].mxu0
    %v343 = vadd.f32 %v124, %v342
    %v344 = vpop.f32.mrb[0].mxu0
    %345 = vdwg.mxu0
    %346 = vst [vmem:[#allocation2] sm:$0xff] %v195
    %347 = vst [vmem:[#allocation2 + $0x8] sm:$0xff] %v197
    %348 = vst [vmem:[#allocation2 + $0x10] sm:$0xff] %v308
    %349 = vst [vmem:[#allocation2 + $0x18] sm:$0xff] %v201
    %350 = vst [vmem:[#allocation2 + $0x20] sm:$0xff] %v203
    %351 = vst [vmem:[#allocation2 + $0x28] sm:$0xff] %v313
    %352 = vst [vmem:[#allocation2 + $0x30] sm:$0xff] %v207
    %353 = vst [vmem:[#allocation2 + $0x38] sm:$0xff] %v209
    %354 = vst [vmem:[#allocation2 + $0x40] sm:$0xff] %v318
    %355 = vst [vmem:[#allocation2 + $0x48] sm:$0xff] %v213
    %356 = vst [vmem:[#allocation2 + $0x50] sm:$0xff] %v215
    %357 = vst [vmem:[#allocation2 + $0x58] sm:$0xff] %v323
    %358 = vst [vmem:[#allocation2 + $0x60] sm:$0xff] %v219
    %359 = vst [vmem:[#allocation2 + $0x68] sm:$0xff] %v221
    %360 = vst [vmem:[#allocation2 + $0x70] sm:$0xff] %v328
    %361 = vst [vmem:[#allocation2 + $0x78] sm:$0xff] %v225
    %362 = vst [vmem:[#allocation2 + $0x80] sm:$0xff] %v227
    %363 = vst [vmem:[#allocation2 + $0x88] sm:$0xff] %v333
    %364 = vst [vmem:[#allocation2 + $0x90] sm:$0xff] %v231
    %365 = vst [vmem:[#allocation2 + $0x98] sm:$0xff] %v233
    %366 = vst [vmem:[#allocation2 + $0xa0] sm:$0xff] %v338
    %367 = vst [vmem:[#allocation2 + $0xa8] sm:$0xff] %v237
    %368 = vst [vmem:[#allocation2 + $0xb0] sm:$0xff] %v239
    %369 = vst [vmem:[#allocation2 + $0xb8] sm:$0xff] %v343
    %v370 = vld [vmem:[#allocation7] sm:$0xff]
    %v371 = vld [vmem:[#allocation7 + $0x8] sm:$0xff]
    %v372 = vld [vmem:[#allocation7 + $0x10] sm:$0xff]
    %v373 = vld [vmem:[#allocation7 + $0x18] sm:$0xff]
    %v374 = vld [vmem:[#allocation7 + $0x20] sm:$0xff]
    %v375 = vld [vmem:[#allocation7 + $0x28] sm:$0xff]
    %v376 = vld [vmem:[#allocation7 + $0x30] sm:$0xff]
    %v377 = vld [vmem:[#allocation7 + $0x38] sm:$0xff]
    %v378 = vld [vmem:[#allocation7 + $0x40] sm:$0xff]
    %v379 = vld [vmem:[#allocation7 + $0x48] sm:$0xff]
    %v380 = vld [vmem:[#allocation7 + $0x50] sm:$0xff]
    %v381 = vld [vmem:[#allocation7 + $0x58] sm:$0xff]
    %v382 = vld [vmem:[#allocation7 + $0x60] sm:$0xff]
    %v383 = vld [vmem:[#allocation7 + $0x68] sm:$0xff]
    %v384 = vld [vmem:[#allocation7 + $0x70] sm:$0xff]
    %v385 = vld [vmem:[#allocation7 + $0x78] sm:$0xff]
    %v386 = vld [vmem:[#allocation7 + $0x80] sm:$0xff]
    %v387 = vld [vmem:[#allocation7 + $0x88] sm:$0xff]
    %v388 = vld [vmem:[#allocation7 + $0x90] sm:$0xff]
    %v389 = vld [vmem:[#allocation7 + $0x98] sm:$0xff]
    %v390 = vld [vmem:[#allocation7 + $0xa0] sm:$0xff]
    %v391 = vld [vmem:[#allocation7 + $0xa8] sm:$0xff]
    %v392 = vld [vmem:[#allocation7 + $0xb0] sm:$0xff]
    %v393 = vld [vmem:[#allocation7 + $0xb8] sm:$0xff]
    %v394 = vld [vmem:[#allocation7 + $0xc0] sm:$0xff]
    %v395 = vld [vmem:[#allocation7 + $0xc8] sm:$0xff]
    %v396 = vld [vmem:[#allocation7 + $0xd0] sm:$0xff]
    %v397 = vld [vmem:[#allocation7 + $0xd8] sm:$0xff]
    %v398 = vld [vmem:[#allocation7 + $0xe0] sm:$0xff]
    %v399 = vld [vmem:[#allocation7 + $0xe8] sm:$0xff]
    %v400 = vld [vmem:[#allocation7 + $0xf0] sm:$0xff]
    %v401 = vld [vmem:[#allocation7 + $0xf8] sm:$0xff]
    %v402 = vld [vmem:[#allocation7 + $0x100] sm:$0xff]
    %v403 = vld [vmem:[#allocation7 + $0x108] sm:$0xff]
    %v404 = vld [vmem:[#allocation7 + $0x110] sm:$0xff]
    %v405 = vld [vmem:[#allocation7 + $0x118] sm:$0xff]
    %v406 = vld [vmem:[#allocation7 + $0x120] sm:$0xff]
    %v407 = vld [vmem:[#allocation7 + $0x128] sm:$0xff]
    %v408 = vld [vmem:[#allocation7 + $0x130] sm:$0xff]
    %v409 = vld [vmem:[#allocation7 + $0x138] sm:$0xff]
    %v410 = vld [vmem:[#allocation7 + $0x140] sm:$0xff]
    %v411 = vld [vmem:[#allocation7 + $0x148] sm:$0xff]
    %v412 = vld [vmem:[#allocation7 + $0x150] sm:$0xff]
    %v413 = vld [vmem:[#allocation7 + $0x158] sm:$0xff]
    %v414 = vld [vmem:[#allocation7 + $0x160] sm:$0xff]
    %v415 = vld [vmem:[#allocation7 + $0x168] sm:$0xff]
    %v416 = vld [vmem:[#allocation7 + $0x170] sm:$0xff]
    %v417 = vld [vmem:[#allocation7 + $0x178] sm:$0xff]
    %v418 = vld [vmem:[%s6] sm:$0x1]
    %v419 = vld [vmem:[%s2] sm:$0xff]
    loop: start=0, step=1, limit=8
    $region38: #{tpu_custom_call.1} parent=1 // loop_pre_header
      _
    $region39: #{tpu_custom_call.1} parent=1 // loop_header
      %s421 = sphi 0, %s425
      %p422 = scmp.ge.s32.totalorder %s421, 8
      %v426 = vphi %v419, %v601
    $region40: #{tpu_custom_call.1} parent=1 // loop_header_branch
      %424 = sbr.rel (%p422) target = $region44
    $region41: #{tpu_custom_call.1} parent=1 // loop_body
      %s427 = smul.u32 %s421, 3
      %s428 = smul.addr %s427, 8
      %s429 = scalar_lea.vmem [#allocation2], %s428
      %v430 = vld [vmem:[%s429] sm:$0xff]
      %v431 = vld [vmem:[%s429 + $0x8] sm:$0xff]
      %v432 = vld [vmem:[%s429 + $0x10] sm:$0xff]
      %433 = vmatprep.subr.mxu0 %v371
      %434 = vmatpush1.msra.mxu0 %v370
      %435 = vmatprep.subr.mxu0 %v374
      %436 = vmatpush1.msra.mxu0 %v373
      %437 = vmatprep.subr.mxu0 %v377
      %438 = vmatpush1.msra.mxu0 %v376
      %439 = vmatprep.subr.mxu0 %v380
      %440 = vmatpush1.msra.mxu0 %v379
      %441 = vmatprep.subr.mxu0 %v383
      %442 = vmatpush1.msra.mxu0 %v382
      %443 = vmatprep.subr.mxu0 %v386
      %444 = vmatpush1.msra.mxu0 %v385
      %445 = vmatprep.subr.mxu0 %v389
      %446 = vmatpush1.msra.mxu0 %v388
      %447 = vmatprep.subr.mxu0 %v392
      %448 = vmatpush1.msra.mxu0 %v391
      %449 = vmatprep.subr.mxu0 %v395
      %450 = vmatpush1.msra.mxu0 %v394
      %451 = vmatprep.subr.mxu0 %v398
      %452 = vmatpush1.msra.mxu0 %v397
      %453 = vmatprep.subr.mxu0 %v401
      %454 = vmatpush1.msra.mxu0 %v400
      %455 = vmatprep.subr.mxu0 %v404
      %456 = vmatpush1.msra.mxu0 %v403
      %457 = vmatprep.subr.mxu0 %v407
      %458 = vmatpush1.msra.mxu0 %v406
      %459 = vmatprep.subr.mxu0 %v410
      %460 = vmatpush1.msra.mxu0 %v409
      %461 = vmatprep.subr.mxu0 %v413
      %462 = vmatpush1.msra.mxu0 %v412
      %463 = vmatprep.subr.mxu0 %v416
      %464 = vmatpush1.msra.mxu0 %v415
      %465 = vmatprep.subr.mxu0 0.0
      %466 = vmatpush1.msra.mxu0 0.0
      %467 = vmatprep.subr.mxu0 0.0
      %468 = vmatpush1.msra.mxu0 0.0
      %469 = vmatprep.subr.mxu0 0.0
      %470 = vmatpush1.msra.mxu0 0.0
      %471 = vmatprep.subr.mxu0 0.0
      %472 = vmatpush1.msra.mxu0 0.0
      %473 = vmatprep.subr.mxu0 0.0
      %474 = vmatpush1.msra.mxu0 0.0
      %475 = vmatprep.subr.mxu0 0.0
      %476 = vmatpush1.msra.mxu0 0.0
      %477 = vmatprep.subr.mxu0 0.0
      %478 = vmatpush1.msra.mxu0 0.0
      %479 = vmatprep.subr.mxu0 0.0
      %480 = vmatpush1.msra.mxu0 0.0
      %481 = vmatprep.subr.mxu0 0.0
      %482 = vmatpush1.msra.mxu0 0.0
      %483 = vmatprep.subr.mxu0 0.0
      %484 = vmatpush1.msra.mxu0 0.0
      %485 = vmatprep.subr.mxu0 0.0
      %486 = vmatpush1.msra.mxu0 0.0
      %487 = vmatprep.subr.mxu0 0.0
      %488 = vmatpush1.msra.mxu0 0.0
      %489 = vmatprep.subr.mxu0 0.0
      %490 = vmatpush1.msra.mxu0 0.0
      %491 = vmatprep.subr.mxu0 0.0
      %492 = vmatpush1.msra.mxu0 0.0
      %493 = vmatprep.subr.mxu0 0.0
      %494 = vmatpush1.msra.mxu0 0.0
      %495 = vmatprep.subr.mxu0 0.0
      %496 = vmatpush1.msra.mxu0 0.0
      %497 = vmatprep.mubr.f32.mxu0 0.0
      %498 = vmatmul.mubr.f32.gmra.mrb[0].mxu0 %v426
      %v499 = vpop.f32.mrb[0].mxu0
      %v500 = vadd.f32 0.0, %v499
      %v501 = vpop.f32.mrb[0].mxu0
      %v502 = vadd.f32 0.0, %v501
      %503 = vdwg.mxu0
      %504 = vmatprep.subr.mxu0 0.0
      %505 = vmatpush1.msra.mxu0 %v372
      %506 = vmatprep.subr.mxu0 0.0
      %507 = vmatpush1.msra.mxu0 %v375
      %508 = vmatprep.subr.mxu0 0.0
      %509 = vmatpush1.msra.mxu0 %v378
      %510 = vmatprep.subr.mxu0 0.0
      %511 = vmatpush1.msra.mxu0 %v381
      %512 = vmatprep.subr.mxu0 0.0
      %513 = vmatpush1.msra.mxu0 %v384
      %514 = vmatprep.subr.mxu0 0.0
      %515 = vmatpush1.msra.mxu0 %v387
      %516 = vmatprep.subr.mxu0 0.0
      %517 = vmatpush1.msra.mxu0 %v390
      %518 = vmatprep.subr.mxu0 0.0
      %519 = vmatpush1.msra.mxu0 %v393
      %520 = vmatprep.subr.mxu0 0.0
      %521 = vmatpush1.msra.mxu0 %v396
      %522 = vmatprep.subr.mxu0 0.0
      %523 = vmatpush1.msra.mxu0 %v399
      %524 = vmatprep.subr.mxu0 0.0
      %525 = vmatpush1.msra.mxu0 %v402
      %526 = vmatprep.subr.mxu0 0.0
      %527 = vmatpush1.msra.mxu0 %v405
      %528 = vmatprep.subr.mxu0 0.0
      %529 = vmatpush1.msra.mxu0 %v408
      %530 = vmatprep.subr.mxu0 0.0
      %531 = vmatpush1.msra.mxu0 %v411
      %532 = vmatprep.subr.mxu0 0.0
      %533 = vmatpush1.msra.mxu0 %v414
      %534 = vmatprep.subr.mxu0 0.0
      %535 = vmatpush1.msra.mxu0 %v417
      %536 = vmatprep.subr.mxu0 0.0
      %537 = vmatpush1.msra.mxu0 0.0
      %538 = vmatprep.subr.mxu0 0.0
      %539 = vmatpush1.msra.mxu0 0.0
      %540 = vmatprep.subr.mxu0 0.0
      %541 = vmatpush1.msra.mxu0 0.0
      %542 = vmatprep.subr.mxu0 0.0
      %543 = vmatpush1.msra.mxu0 0.0
      %544 = vmatprep.subr.mxu0 0.0
      %545 = vmatpush1.msra.mxu0 0.0
      %546 = vmatprep.subr.mxu0 0.0
      %547 = vmatpush1.msra.mxu0 0.0
      %548 = vmatprep.subr.mxu0 0.0
      %549 = vmatpush1.msra.mxu0 0.0
      %550 = vmatprep.subr.mxu0 0.0
      %551 = vmatpush1.msra.mxu0 0.0
      %552 = vmatprep.subr.mxu0 0.0
      %553 = vmatpush1.msra.mxu0 0.0
      %554 = vmatprep.subr.mxu0 0.0
      %555 = vmatpush1.msra.mxu0 0.0
      %556 = vmatprep.subr.mxu0 0.0
      %557 = vmatpush1.msra.mxu0 0.0
      %558 = vmatprep.subr.mxu0 0.0
      %559 = vmatpush1.msra.mxu0 0.0
      %560 = vmatprep.subr.mxu0 0.0
      %561 = vmatpush1.msra.mxu0 0.0
      %562 = vmatprep.subr.mxu0 0.0
      %563 = vmatpush1.msra.mxu0 0.0
      %564 = vmatprep.subr.mxu0 0.0
      %565 = vmatpush1.msra.mxu0 0.0
      %566 = vmatprep.subr.mxu0 0.0
      %567 = vmatpush1.msra.mxu0 0.0
      %568 = vmatprep.mubr.f32.mxu0 0.0
      %569 = vmatmul.mubr.f32.gmra.mrb[0].mxu0 %v426
      %v570 = vpop.f32.mrb[0].mxu0
      %v571 = vadd.f32 0.0, %v570
      %v572 = vpop.f32.mrb[0].mxu0
      %573 = vdwg.mxu0
      %v574 = vadd.f32 %v430, %v500
      %v575 = vxor.u32 %v574, 2147483648
      %v576 = vmul.f32 %v575, 1.442695
      %v577 = vpow.pop %v576
      %v578 = vadd.f32 %v577, 1.0
      %v579 = vrcp.pop %v578
      %v580 = vmul.f32 1.0, %v579
      %v581 = vadd.f32 %v431, %v502
      %v582 = vxor.u32 %v581, 2147483648
      %v583 = vmul.f32 %v582, 1.442695
      %v584 = vpow.pop %v583
      %v585 = vadd.f32 %v584, 1.0
      %v586 = vrcp.pop %v585
      %v587 = vmul.f32 1.0, %v586
      %v589 = vlaneseq
      %v590 = vshrl.u32 %v589, 7
      %v591 = vsub.s32 0, %v590
      %v592 = vrot.slane %v418, %v591
      %v594 = vadd.f32 %v571, %v592
      %v595 = vmul.f32 %v580, %v594
      %v596 = vadd.f32 %v432, %v595
      %v597 = vtanh.pop %v596
      %v598 = vsub.f32 1.0, %v587
      %v599 = vmul.f32 %v598, %v597
      %v600 = vmul.f32 %v587, %v426
      %v601 = vadd.f32 %v599, %v600
      %s602 = smul.u32 %s421, 8
      %s603 = scalar_lea.vmem [#allocation3], %s602
      %604 = vst [vmem:[%s603] sm:$0xff] %v601
    $region42: #{tpu_custom_call.1} parent=1 // loop_footer
      %s425 = sadd.s32 1, %s421
    $region43: #{tpu_custom_call.1} parent=1 // loop_footer_branch
      %420 = sbr.rel target = $region39
    $region44: #{tpu_custom_call.1} parent=1 // loop_exit
      _
    %v605 = vld [vmem:[#allocation3] sm:$0xff]
    %v606 = vld [vmem:[#allocation3 + $0x8] sm:$0xff]
    %v607 = vld [vmem:[#allocation3 + $0x10] sm:$0xff]
    %v608 = vld [vmem:[#allocation3 + $0x18] sm:$0xff]
    %v609 = vld [vmem:[#allocation3 + $0x20] sm:$0xff]
    %v610 = vld [vmem:[#allocation3 + $0x28] sm:$0xff]
    %v611 = vld [vmem:[#allocation3 + $0x30] sm:$0xff]
    %v612 = vld [vmem:[#allocation3 + $0x38] sm:$0xff]
    %v613 = vld [vmem:[%s1] sm:$0xff]
    %v614 = vld [vmem:[%s1 + $0x8] sm:$0xff]
    %v615 = vld [vmem:[%s1 + $0x10] sm:$0xff]
    %v616 = vld [vmem:[%s1 + $0x18] sm:$0xff]
    %v617 = vld [vmem:[%s1 + $0x20] sm:$0xff]
    %v618 = vld [vmem:[%s1 + $0x28] sm:$0xff]
    %v619 = vld [vmem:[%s1 + $0x30] sm:$0xff]
    %v620 = vld [vmem:[%s1 + $0x38] sm:$0xff]
    %622 = vset.pattern.permute.xlu0 0
    %623 = vperm.xlu0 %622, %v613
    %v624 = vpop.permute.xlu0 %623
    %627 = vset.pattern.permute.xlu0 0
    %628 = vperm.xlu0 %627, %v614
    %v629 = vpop.permute.xlu0 %628
    %632 = vset.pattern.permute.xlu0 0
    %633 = vperm.xlu0 %632, %v615
    %v634 = vpop.permute.xlu0 %633
    %637 = vset.pattern.permute.xlu0 0
    %638 = vperm.xlu0 %637, %v616
    %v639 = vpop.permute.xlu0 %638
    %642 = vset.pattern.permute.xlu0 0
    %643 = vperm.xlu0 %642, %v617
    %v644 = vpop.permute.xlu0 %643
    %647 = vset.pattern.permute.xlu0 0
    %648 = vperm.xlu0 %647, %v618
    %v649 = vpop.permute.xlu0 %648
    %652 = vset.pattern.permute.xlu0 0
    %653 = vperm.xlu0 %652, %v619
    %v654 = vpop.permute.xlu0 %653
    %657 = vset.pattern.permute.xlu0 0
    %658 = vperm.xlu0 %657, %v620
    %v659 = vpop.permute.xlu0 %658
    %v661 = vmul.f32 %v605, %v624
    %v662 = vmul.f32 %v606, %v629
    %v663 = vmul.f32 %v607, %v634
    %v664 = vmul.f32 %v608, %v639
    %v665 = vmul.f32 %v609, %v644
    %v666 = vmul.f32 %v610, %v649
    %v667 = vmul.f32 %v611, %v654
    %v668 = vmul.f32 %v612, %v659
    %669 = vst [vmem:[#allocation9] sm:$0xff] %v661
    %670 = vst [vmem:[#allocation9 + $0x8] sm:$0xff] %v662
    %671 = vst [vmem:[#allocation9 + $0x10] sm:$0xff] %v663
    %672 = vst [vmem:[#allocation9 + $0x18] sm:$0xff] %v664
    %673 = vst [vmem:[#allocation9 + $0x20] sm:$0xff] %v665
    %674 = vst [vmem:[#allocation9 + $0x28] sm:$0xff] %v666
    %675 = vst [vmem:[#allocation9 + $0x30] sm:$0xff] %v667
    %676 = vst [vmem:[#allocation9 + $0x38] sm:$0xff] %v668
    // Predicated region
    $region45: #{tpu_custom_call.1} parent=1 // pred_check
      _
    $region46: #{tpu_custom_call.1} parent=1 // pred_check_branch
      %678 = sbr.rel (0) target = $region48
    $region47: #{tpu_custom_call.1} parent=1 // pred_region
      %s680 = ssub.s32 1024, 1024
      %681 = vsyncadd [#allocation6], %s680
      %s682 = sshll.u32 [#allocation9], 4
      %s683 = int_to_ptr.vmem [resolvable:$true] %s682
      %688 = dma.vmem_to_hbm [thread:$0]  %s683, 1024, %s7, [#allocation6], 128, 128, 8
    $region48: #{tpu_custom_call.1} parent=1 // pred_fallthru
      _
    // Predicated region
    $region49: #{tpu_custom_call.1} parent=1 // pred_check
      _
    $region50: #{tpu_custom_call.1} parent=1 // pred_check_branch
      %690 = sbr.rel (0) target = $region52
    $region51: #{tpu_custom_call.1} parent=1 // pred_region
      %691 = dma.done [#allocation6], 1024
    $region52: #{tpu_custom_call.1} parent=1 // pred_fallthru
      _
    %692 = vsyncpa [#allocation5], 1
    %693 = vsyncpa [#allocation8], 1
    %694 = vsyncpa [#allocation6], 1

</llo_original>
